<compile_context>
chip_gen: v5e
topology: v5e:2x2
jax: 0.10.0
libtpu: 0.0.40
codegen_flags: <defaults>
</compile_context>

<pallas_src>
import functools

import jax
import jax.numpy as jnp
from jax.experimental import pallas as pl
from jax.experimental.pallas import tpu as pltpu


def _vmem_capacity_bytes() -> int:
    """Physical VMEM per core; conservative 64 MiB fallback (v7x-safe)."""
    try:
        info = pltpu.get_tpu_info()
        cap = getattr(info, "vmem_capacity_bytes", None)
        if cap:
            return int(cap)
    except Exception:
        pass
    return 64 << 20


def _swish_kernel(x_ref, o_ref, *, half_beta: float):
    x = x_ref[...]
    xf = x.astype(jnp.float32)
    # sigmoid(beta*x) = 0.5 * (1 + tanh(0.5*beta*x)) -- one EUP op, bounded.
    sig = 0.5 * (1.0 + jnp.tanh(xf * half_beta))
    o_ref[...] = (xf * sig).astype(o_ref.dtype)


def swiglu(
    x: jnp.ndarray,
    beta: float = 1.0,
    *,
    lane_width: int = 1024,            # multiple of 128 -> fully lane-dense
    target_block_bytes: int | None = None,  # None -> auto per TPU generation
) -> jnp.ndarray:
    """Elementwise x * sigmoid(beta * x) via a lane-dense Pallas TPU kernel."""
    orig_shape = x.shape
    orig_dtype = x.dtype
    n = x.size
    if n == 0:
        return x

    itemsize = jnp.dtype(orig_dtype).itemsize
    sublane = max(8, 32 // itemsize)        # 8 f32, 16 bf16, 32 int8/fp8
    bytes_per_row = lane_width * itemsize

    if target_block_bytes is None:
        vmem_cap = _vmem_capacity_bytes()
        # v5e/v6e (128 MiB) -> 96 MiB limit, 16 MiB blocks.
        # v7x (64 MiB)      -> 48 MiB limit, ~9.6 MiB blocks.
        vmem_limit = min(vmem_cap * 3 // 4, 112 << 20)
        target_block_bytes = min(16 << 20, vmem_limit // 5)
    else:
        vmem_limit = min(max(6 * target_block_bytes, 8 << 20), 112 << 20)

    # Tail-pad only when n is not a multiple of lane_width (< lane_width extra
    # zeros; swish(0) == 0 so they are harmless and sliced off afterwards).
    rows = pl.cdiv(n, lane_width)
    n_rounded = rows * lane_width
    flat = x.reshape(-1)
    padded = n_rounded != n
    if padded:
        flat = jnp.pad(flat, (0, n_rounded - n))
    x2d = flat.reshape(rows, lane_width)

    # Block rows: multiple of the dtype sublane tile, ~target_block_bytes of
    # input per grid step; a single full-array block for small inputs.
    target_rows = max(sublane, (target_block_bytes // bytes_per_row) // sublane * sublane)
    block_rows = rows if rows <= target_rows else target_rows

    grid = (pl.cdiv(rows, block_rows),)     # ragged last block handled by Pallas
    kernel = functools.partial(_swish_kernel, half_beta=0.5 * float(beta))

    out2d = pl.pallas_call(
        kernel,
        out_shape=jax.ShapeDtypeStruct((rows, lane_width), orig_dtype),
        grid=grid,
        in_specs=[pl.BlockSpec((block_rows, lane_width), lambda i: (i, 0))],
        out_specs=pl.BlockSpec((block_rows, lane_width), lambda i: (i, 0)),
        compiler_params=pltpu.CompilerParams(
            dimension_semantics=("parallel",),   # 2-TC sharding on v7x
            vmem_limit_bytes=int(vmem_limit),
        ),
    )(x2d)

    out = out2d.reshape(-1)
    if padded:
        out = out[:n]
    return out.reshape(orig_shape)


def _reference(x, beta):
    return x * (1.0 / (1.0 + jnp.exp(-x * beta)))


if __name__ == "__main__":
    # ModelConfig.swiglu_beta -- deterministic, set in-script.
    swiglu_beta = 1.5

    # Small shape consistent with the forward: [batch=2, seq=8, hidden=32].
    key = jax.random.PRNGKey(0)
    x = jax.random.normal(key, (2, 8, 32), dtype=jnp.float32)
    out = jax.block_until_ready(swiglu(x, beta=swiglu_beta))
    ref = _reference(x, swiglu_beta)
    assert out.shape == x.shape and out.dtype == x.dtype
    assert jnp.allclose(out, ref, atol=1e-3, rtol=1e-3)

    # Ragged, non-multiple-of-anything shape (exercises tail-pad path).
    k1, k2, k3 = jax.random.split(jax.random.PRNGKey(1), 3)
    x2 = jax.random.normal(k1, (3, 7, 33), dtype=jnp.float32)
    out2 = jax.block_until_ready(swiglu(x2, beta=swiglu_beta))
    assert jnp.allclose(out2, _reference(x2, swiglu_beta), atol=1e-3, rtol=1e-3)

    # Multi-step grid with a ragged last block (small explicit tile override):
    # rows = cdiv(10400, 128) = 82, block_rows = 8 -> 11 steps, last partial.
    x3 = jax.random.normal(k2, (4, 20, 130), dtype=jnp.float32)
    out3 = jax.block_until_ready(
        swiglu(x3, beta=swiglu_beta, lane_width=128, target_block_bytes=8 * 128 * 4)
    )
    assert out3.shape == x3.shape
    assert jnp.allclose(out3, _reference(x3, swiglu_beta), atol=1e-3, rtol=1e-3)

    # Numerical-stability check at extreme inputs (no NaN/inf from sigmoid).
    x4 = jnp.array([[-100.0, -10.0, -1.0, 0.0, 1.0, 10.0, 100.0, 50.0]],
                   dtype=jnp.float32)
    out4 = jax.block_until_ready(swiglu(x4, beta=swiglu_beta))
    assert jnp.all(jnp.isfinite(out4))
    assert jnp.allclose(out4, _reference(x4, swiglu_beta), atol=1e-3, rtol=1e-3)

    # bf16 path (sublane multiple 16, compute upcast to f32 inside the kernel).
    x5 = jax.random.normal(k3, (2, 8, 32), dtype=jnp.bfloat16)
    out5 = jax.block_until_ready(swiglu(x5, beta=swiglu_beta))
    ref5 = _reference(x5.astype(jnp.float32), swiglu_beta).astype(jnp.bfloat16)
    assert out5.dtype == jnp.bfloat16
    assert jnp.allclose(out5.astype(jnp.float32), ref5.astype(jnp.float32),
                        atol=2e-2, rtol=2e-2)

    print("KERNEL_OK")
</pallas_src>

<mosaic_0001>
module attributes {stable_mosaic.version = 11 : i64} {
  func.func @_swish_kernel(%arg0: i32, %arg1: memref<1x1024xf32, #tpu.memory_space<vmem>>, %arg2: memref<1x1024xf32, #tpu.memory_space<vmem>>) attributes {dimension_semantics = [#tpu.dimension_semantics<parallel>], iteration_bounds = array<i64: 1>, scalar_prefetch = 0 : i64, scratch_operands = 0 : i64, tpu.core_type = #tpu.core_type<tc>, window_params = [{transform_indices = @transform_0, window_bounds = array<i64: 1, 1024>}, {transform_indices = @transform_1, window_bounds = array<i64: 1, 1024>}]} {
    %c0 = arith.constant 0 : index
    %c0_0 = arith.constant 0 : index
    %0 = vector.load %arg1[%c0, %c0_0] : memref<1x1024xf32, #tpu.memory_space<vmem>>, vector<1x1024xf32>
    %cst = arith.constant 7.500000e-01 : f32
    %1 = vector.broadcast %cst : f32 to vector<1x1024xf32>
    %2 = arith.mulf %0, %1 : vector<1x1024xf32>
    %3 = math.tanh %2 : vector<1x1024xf32>
    %cst_1 = arith.constant 1.000000e+00 : f32
    %4 = vector.broadcast %cst_1 : f32 to vector<1x1024xf32>
    %5 = arith.addf %4, %3 : vector<1x1024xf32>
    %cst_2 = arith.constant 5.000000e-01 : f32
    %6 = vector.broadcast %cst_2 : f32 to vector<1x1024xf32>
    %7 = arith.mulf %6, %5 : vector<1x1024xf32>
    %8 = arith.mulf %0, %7 : vector<1x1024xf32>
    %c0_3 = arith.constant 0 : index
    %c0_4 = arith.constant 0 : index
    %9 = vector.load %arg2[%c0_3, %c0_4] : memref<1x1024xf32, #tpu.memory_space<vmem>>, vector<1x1024xf32>
    tpu.vector_store %arg2[%c0_3, %c0_4], %8 {strides = array<i32>} : memref<1x1024xf32, #tpu.memory_space<vmem>>, vector<1x1024xf32>,
    return
  }
  func.func @transform_0(%arg0: i32) -> (i32, i32) {
    %c0_i32 = arith.constant 0 : i32
    %c0_i32_0 = arith.constant 0 : i32
    return %arg0, %c0_i32 : i32, i32
  }
  func.func @transform_1(%arg0: i32) -> (i32, i32) {
    %c0_i32 = arith.constant 0 : i32
    %c0_i32_0 = arith.constant 0 : i32
    return %arg0, %c0_i32 : i32, i32
  }
}

</mosaic_0001>

<llo_original>
// kernel: tpu_custom_call.1
$region0: #{tpu_custom_call.1}
  #allocation0 [shape = 'u32[]', space=smem, size = 0x4, offset = 0x4, fixed_abs, tag = 'smem constant byte address 0x4 - core index']
  #allocation1 [shape = 'u32[72,128]{1,0:T(1,128)}', space=vmem, size = 0x9000, scoped, tag = 'internal scratch']
  %s0 = inlined_call_operand.hbm [shape: f32[1,1024], index: 0, kind: input, shape index: {}]
  %s1 = inlined_call_operand.hbm [shape: f32[1,1024], index: 1, kind: output, shape index: {}]
  %s2 = sld [smem:[#allocation0]]
  $region18: #{tpu_custom_call.1} parent=0
    _
  %s4 = ssub.s32 1, %s2
  %s5 = scalar_select 0, %s4, %s2
  $region1: #{tpu_custom_call.1} parent=0
    #allocation2 [shape = 'u8[4096]{0}', space=vmem, size = 0x1000, scoped, tag = 'input window, operand 0, single buffered']
    #allocation3 [shape = 's32[1]{0}', space=sflag, size = 0x4, scoped, tag = 'scoped memory for tpu_custom_call.1']
    #allocation4 [shape = 's32[1]{0}', space=sflag, size = 0x4, scoped, tag = 'scoped memory for tpu_custom_call.1']
    #allocation5 [shape = 'u8[4096]{0}', space=vmem, size = 0x1000, scoped, tag = 'output window, operand 0, single buffered']
    %6 = vsyncpa [#allocation3], 0
    %7 = vsyncpa [#allocation4], 0
    // Predicated region
    $region2: #{tpu_custom_call.1} parent=1 // pred_check
      _
    $region3: #{tpu_custom_call.1} parent=1 // pred_check_branch
      %9 = sbr.rel (0) target = $region5
    $region4: #{tpu_custom_call.1} parent=1 // pred_region
      %11 = vsyncadd [#allocation3], 0
      %s13 = sshll.u32 %s0, 4
      %s14 = int_to_ptr.hbm [resolvable:$true] %s13
      %s15 = sshll.u32 [#allocation2], 4
      %s16 = int_to_ptr.vmem [resolvable:$true] %s15
      %18 = dma.hbm_to_vmem [thread:$0]  %s14, 128, %s16, [#allocation3]
    $region5: #{tpu_custom_call.1} parent=1 // pred_fallthru
      _
    // Predicated region
    $region6: #{tpu_custom_call.1} parent=1 // pred_check
      _
    $region7: #{tpu_custom_call.1} parent=1 // pred_check_branch
      %20 = sbr.rel (0) target = $region9
    $region8: #{tpu_custom_call.1} parent=1 // pred_region
      %22 = dma.done [#allocation3], 128
    $region9: #{tpu_custom_call.1} parent=1 // pred_fallthru
      _
    %v23 = vld [vmem:[#allocation2] sm:$0xff]
    %v24 = vmul.f32 %v23, 0.75
    %v25 = vtanh.pop %v24
    %v26 = vadd.f32 %v25, 1.0
    %v27 = vmul.f32 %v26, 0.5
    %v28 = vmul.f32 %v23, %v27
    %29 = vst [vmem:[#allocation5] sm:$0xff] %v28
    // Predicated region
    $region10: #{tpu_custom_call.1} parent=1 // pred_check
      _
    $region11: #{tpu_custom_call.1} parent=1 // pred_check_branch
      %31 = sbr.rel (0) target = $region13
    $region12: #{tpu_custom_call.1} parent=1 // pred_region
      %33 = vsyncadd [#allocation4], 0
      %s35 = sshll.u32 [#allocation5], 4
      %s36 = int_to_ptr.vmem [resolvable:$true] %s35
      %s37 = sshll.u32 %s1, 4
      %s38 = int_to_ptr.hbm [resolvable:$true] %s37
      %40 = dma.vmem_to_hbm [thread:$0]  %s36, 128, %s38, [#allocation4]
    $region13: #{tpu_custom_call.1} parent=1 // pred_fallthru
      _
    // Predicated region
    $region14: #{tpu_custom_call.1} parent=1 // pred_check
      _
    $region15: #{tpu_custom_call.1} parent=1 // pred_check_branch
      %42 = sbr.rel (0) target = $region17
    $region16: #{tpu_custom_call.1} parent=1 // pred_region
      %44 = dma.done [#allocation4], 128
    $region17: #{tpu_custom_call.1} parent=1 // pred_fallthru
      _
    %45 = vsyncpa [#allocation3], 1
    %46 = vsyncpa [#allocation4], 1

</llo_original>
